<compile_context>
chip_gen: v6e
topology: v6e:2x2x1
jax: 0.10.0
libtpu: 0.0.40
codegen_flags: <defaults>
</compile_context>

<pallas_src>
import functools

import jax
import jax.numpy as jnp
from jax.experimental import pallas as pl
from jax.experimental.pallas import tpu as pltpu


def _round_up(x, m):
    return ((x + m - 1) // m) * m


def _mlp_kernel(x_ref, w1_ref, b1_ref, w2_ref, b2_ref, out_ref):
    # x_ref:  (TM, K_pad)      bf16
    # w1_ref: (K_pad, H_pad)   bf16   fused (down @ c1_lat | c1_beh) weight
    # b1_ref: (1, H_pad)       f32    fused bias
    # w2_ref: (H_pad, N_pad)   bf16
    # b2_ref: (1, N_pad)       f32
    # out_ref:(TM, N_pad)      f32
    h = jnp.dot(x_ref[...], w1_ref[...], preferred_element_type=jnp.float32)
    h = jnp.maximum(h + b1_ref[...], 0.0)                      # ReLU in f32
    out = jnp.dot(h.astype(w2_ref.dtype), w2_ref[...],
                  preferred_element_type=jnp.float32)
    out_ref[...] = out + b2_ref[...]


def _fuse_params(params, hidden_dim):
    """Fold downsample + classifier[0] into one (K, hidden) matmul (f32)."""
    w_down = params["w_down"]                 # (hidden, foyer)
    b_down = params["b_down"]                 # (hidden,)
    w_c1 = params["w_c1"]                     # (hidden, hidden + behavioral)
    b_c1 = params["b_c1"]                     # (hidden,)

    w_c1_lat = w_c1[:, :hidden_dim]           # (hidden, hidden)
    w_c1_beh = w_c1[:, hidden_dim:]           # (hidden, behavioral)

    # [foyer, beh] @ W_fused + b_fused  ==  combined @ W_c1.T + b_c1
    w_fused_foyer = w_down.T @ w_c1_lat.T     # (foyer, hidden)
    w_fused_beh = w_c1_beh.T                  # (behavioral, hidden)
    w_fused = jnp.concatenate([w_fused_foyer, w_fused_beh], axis=0)
    b_fused = b_down @ w_c1_lat.T + b_c1      # (hidden,)
    return w_fused, b_fused


@functools.partial(jax.jit, static_argnames=("tm",))
def simple_mlp_forward(foyer, behavioral, params, *, tm=None):
    """SimpleMLP forward pass via a single batch-tiled Pallas kernel."""
    B = foyer.shape[0]
    hidden_dim = params["w_down"].shape[0]
    n_machines = params["w_c2"].shape[0]
    K = foyer.shape[1] + behavioral.shape[1]

    # Padded (lane-aligned) dims.
    K_pad = _round_up(K, 128)
    H_pad = _round_up(hidden_dim, 128)
    N_pad = _round_up(n_machines, 128)

    # Batch tile: multiple of 8, big enough to amortize per-step overhead but
    # tiny against VMEM (blocks are only a few hundred KB even at TM=512,
    # which fits v7x's 64 MiB VMEM with large margin).
    if tm is None:
        tm = min(512, _round_up(B, 8))
    B_pad = _round_up(B, tm)

    # --- host-side weight fusion + padding (one-time, f32) -------------------
    w_fused, b_fused = _fuse_params(params, hidden_dim)
    w2 = params["w_c2"].T                      # (hidden, n_machines)
    b2 = params["b_c2"]

    w1_p = jnp.zeros((K_pad, H_pad), jnp.float32).at[:K, :hidden_dim].set(w_fused)
    b1_p = jnp.zeros((1, H_pad), jnp.float32).at[0, :hidden_dim].set(b_fused)
    w2_p = jnp.zeros((H_pad, N_pad), jnp.float32).at[:hidden_dim, :n_machines].set(w2)
    b2_p = jnp.zeros((1, N_pad), jnp.float32).at[0, :n_machines].set(b2)

    # Concatenate activations once; pad batch + K; bf16 for the MXU / HBM path.
    x_cat = jnp.concatenate([foyer, behavioral], axis=1)       # (B, K)
    x_p = jnp.zeros((B_pad, K_pad), jnp.float32).at[:B, :K].set(x_cat)

    x_p = x_p.astype(jnp.bfloat16)
    w1_p = w1_p.astype(jnp.bfloat16)
    w2_p = w2_p.astype(jnp.bfloat16)

    grid = (B_pad // tm,)

    out_padded = pl.pallas_call(
        _mlp_kernel,
        out_shape=jax.ShapeDtypeStruct((B_pad, N_pad), jnp.float32),
        grid=grid,
        in_specs=[
            pl.BlockSpec((tm, K_pad), lambda i: (i, 0)),       # activations: tiled
            pl.BlockSpec((K_pad, H_pad), lambda i: (0, 0)),    # fused W1: resident
            pl.BlockSpec((1, H_pad), lambda i: (0, 0)),        # fused b1: resident
            pl.BlockSpec((H_pad, N_pad), lambda i: (0, 0)),    # W2: resident
            pl.BlockSpec((1, N_pad), lambda i: (0, 0)),        # b2: resident
        ],
        out_specs=pl.BlockSpec((tm, N_pad), lambda i: (i, 0)), # lane-dense output
        compiler_params=pltpu.CompilerParams(
            dimension_semantics=("parallel",)),                # v7x: 2 TCs
    )(x_p, w1_p, b1_p, w2_p, b2_p)

    return out_padded[:B, :n_machines]


def init_params(key, foyer_dim, behavioral_dim, hidden_dim=32, n_machines=4):
    """Deterministic synthetic parameters, PyTorch Linear conventions."""
    ks = jax.random.split(key, 6)

    def uniform(k, shape, fan_in):
        bound = 1.0 / jnp.sqrt(fan_in)
        return jax.random.uniform(k, shape, jnp.float32, -bound, bound)

    return {
        "w_down": uniform(ks[0], (hidden_dim, foyer_dim), foyer_dim),
        "b_down": uniform(ks[1], (hidden_dim,), foyer_dim),
        "w_c1": uniform(ks[2], (hidden_dim, hidden_dim + behavioral_dim),
                        hidden_dim + behavioral_dim),
        "b_c1": uniform(ks[3], (hidden_dim,), hidden_dim + behavioral_dim),
        "w_c2": uniform(ks[4], (n_machines, hidden_dim), hidden_dim),
        "b_c2": uniform(ks[5], (n_machines,), hidden_dim),
    }


def reference_forward(foyer, behavioral, params):
    """Pure-JAX f32 reference matching the PyTorch module exactly."""
    latent = foyer @ params["w_down"].T + params["b_down"]
    combined = jnp.concatenate([latent, behavioral], axis=1)
    h = jnp.maximum(combined @ params["w_c1"].T + params["b_c1"], 0.0)
    return h @ params["w_c2"].T + params["b_c2"]


if __name__ == "__main__":
    B = 8
    foyer_dim = 64
    behavioral_dim = 16
    hidden_dim = 32
    n_machines = 4

    key = jax.random.PRNGKey(0)
    k_p, k_f, k_b = jax.random.split(key, 3)

    params = init_params(k_p, foyer_dim, behavioral_dim, hidden_dim, n_machines)
    foyer = jax.random.normal(k_f, (B, foyer_dim), jnp.float32)
    behavioral = jax.random.normal(k_b, (B, behavioral_dim), jnp.float32)

    out = simple_mlp_forward(foyer, behavioral, params)
    out = jax.block_until_ready(out)

    ref = reference_forward(foyer, behavioral, params)
    assert out.shape == (B, n_machines)
    # bf16 activations/weights with f32 accumulation -> loose tolerance vs f32 ref.
    assert jnp.allclose(out, ref, atol=5e-2, rtol=5e-2), "mismatch vs reference"

    print("KERNEL_OK")
</pallas_src>

<mosaic_0001>
module attributes {stable_mosaic.version = 11 : i64} {
  func.func @_mlp_kernel(%arg0: i32, %arg1: memref<8x128xbf16, #tpu.memory_space<vmem>>, %arg2: memref<128x128xbf16, #tpu.memory_space<vmem>>, %arg3: memref<1x128xf32, #tpu.memory_space<vmem>>, %arg4: memref<128x128xbf16, #tpu.memory_space<vmem>>, %arg5: memref<1x128xf32, #tpu.memory_space<vmem>>, %arg6: memref<8x128xf32, #tpu.memory_space<vmem>>) attributes {dimension_semantics = [#tpu.dimension_semantics<parallel>], iteration_bounds = array<i64: 1>, scalar_prefetch = 0 : i64, scratch_operands = 0 : i64, tpu.core_type = #tpu.core_type<tc>, window_params = [{transform_indices = @transform_0, window_bounds = array<i64: 8, 128>}, {pipeline_mode = #tpu.pipeline_mode<synchronous>, transform_indices = @transform_1, window_bounds = array<i64: 128, 128>}, {pipeline_mode = #tpu.pipeline_mode<synchronous>, transform_indices = @transform_2, window_bounds = array<i64: 1, 128>}, {pipeline_mode = #tpu.pipeline_mode<synchronous>, transform_indices = @transform_3, window_bounds = array<i64: 128, 128>}, {pipeline_mode = #tpu.pipeline_mode<synchronous>, transform_indices = @transform_4, window_bounds = array<i64: 1, 128>}, {transform_indices = @transform_5, window_bounds = array<i64: 8, 128>}]} {
    %c0 = arith.constant 0 : index
    %c0_0 = arith.constant 0 : index
    %0 = vector.load %arg1[%c0, %c0_0] : memref<8x128xbf16, #tpu.memory_space<vmem>>, vector<8x128xbf16>
    %c0_1 = arith.constant 0 : index
    %c0_2 = arith.constant 0 : index
    %1 = vector.load %arg2[%c0_1, %c0_2] : memref<128x128xbf16, #tpu.memory_space<vmem>>, vector<128x128xbf16>
    %cst = arith.constant dense<0.000000e+00> : vector<8x128xf32>
    %2 = tpu.matmul %0, %1, %cst {dimension_numbers = #tpu.dot_dimension_numbers<[1], [0], [0], [1], [0, 0, 1, 1], [], []>} : vector<8x128xbf16>, vector<128x128xbf16>, vector<8x128xf32> -> vector<8x128xf32>
    %c0_3 = arith.constant 0 : index
    %c0_4 = arith.constant 0 : index
    %3 = vector.load %arg3[%c0_3, %c0_4] : memref<1x128xf32, #tpu.memory_space<vmem>>, vector<1x128xf32>
    %4 = vector.broadcast %3 : vector<1x128xf32> to vector<8x128xf32>
    %5 = arith.addf %2, %4 : vector<8x128xf32>
    %cst_5 = arith.constant 0.000000e+00 : f32
    %6 = vector.broadcast %cst_5 : f32 to vector<8x128xf32>
    %7 = arith.maximumf %5, %6 : vector<8x128xf32>
    %8 = arith.truncf %7 : vector<8x128xf32> to vector<8x128xbf16>
    %c0_6 = arith.constant 0 : index
    %c0_7 = arith.constant 0 : index
    %9 = vector.load %arg4[%c0_6, %c0_7] : memref<128x128xbf16, #tpu.memory_space<vmem>>, vector<128x128xbf16>
    %cst_8 = arith.constant dense<0.000000e+00> : vector<8x128xf32>
    %10 = tpu.matmul %8, %9, %cst_8 {dimension_numbers = #tpu.dot_dimension_numbers<[1], [0], [0], [1], [0, 0, 1, 1], [], []>} : vector<8x128xbf16>, vector<128x128xbf16>, vector<8x128xf32> -> vector<8x128xf32>
    %c0_9 = arith.constant 0 : index
    %c0_10 = arith.constant 0 : index
    %11 = vector.load %arg5[%c0_9, %c0_10] : memref<1x128xf32, #tpu.memory_space<vmem>>, vector<1x128xf32>
    %12 = vector.broadcast %11 : vector<1x128xf32> to vector<8x128xf32>
    %13 = arith.addf %10, %12 : vector<8x128xf32>
    %c0_11 = arith.constant 0 : index
    %c0_12 = arith.constant 0 : index
    %14 = vector.load %arg6[%c0_11, %c0_12] : memref<8x128xf32, #tpu.memory_space<vmem>>, vector<8x128xf32>
    tpu.vector_store %arg6[%c0_11, %c0_12], %13 {strides = array<i32>} : memref<8x128xf32, #tpu.memory_space<vmem>>, vector<8x128xf32>,
    return
  }
  func.func @transform_0(%arg0: i32) -> (i32, i32) {
    %c0_i32 = arith.constant 0 : i32
    %c0_i32_0 = arith.constant 0 : i32
    return %arg0, %c0_i32 : i32, i32
  }
  func.func @transform_1(%arg0: i32) -> (i32, i32) {
    %c0_i32 = arith.constant 0 : i32
    %c0_i32_0 = arith.constant 0 : i32
    %c0_i32_1 = arith.constant 0 : i32
    return %c0_i32, %c0_i32_0 : i32, i32
  }
  func.func @transform_2(%arg0: i32) -> (i32, i32) {
    %c0_i32 = arith.constant 0 : i32
    %c0_i32_0 = arith.constant 0 : i32
    %c0_i32_1 = arith.constant 0 : i32
    return %c0_i32, %c0_i32_0 : i32, i32
  }
  func.func @transform_3(%arg0: i32) -> (i32, i32) {
    %c0_i32 = arith.constant 0 : i32
    %c0_i32_0 = arith.constant 0 : i32
    %c0_i32_1 = arith.constant 0 : i32
    return %c0_i32, %c0_i32_0 : i32, i32
  }
  func.func @transform_4(%arg0: i32) -> (i32, i32) {
    %c0_i32 = arith.constant 0 : i32
    %c0_i32_0 = arith.constant 0 : i32
    %c0_i32_1 = arith.constant 0 : i32
    return %c0_i32, %c0_i32_0 : i32, i32
  }
  func.func @transform_5(%arg0: i32) -> (i32, i32) {
    %c0_i32 = arith.constant 0 : i32
    %c0_i32_0 = arith.constant 0 : i32
    return %arg0, %c0_i32 : i32, i32
  }
}

</mosaic_0001>

<llo_original>
// kernel: simple_mlp_forward.1
$region0: #{simple_mlp_forward.1}
  #allocation0 [shape = 'u32[]', space=smem, size = 0x4, offset = 0x4, fixed_abs, tag = 'smem constant byte address 0x4 - core index']
  #allocation1 [shape = 'u32[144,128]{1,0:T(1,128)}', space=vmem, size = 0x12000, scoped, tag = 'internal scratch']
  %s0 = inlined_call_operand.vmem [shape: bf16[8,128], index: 0, kind: input, shape index: {}]
  %s1 = inlined_call_operand.vmem [shape: bf16[128,128], index: 1, kind: input, shape index: {}]
  %s2 = inlined_call_operand.vmem [shape: f32[1,128], index: 2, kind: input, shape index: {}]
  %s3 = inlined_call_operand.vmem [shape: bf16[128,128], index: 3, kind: input, shape index: {}]
  %s4 = inlined_call_operand.vmem [shape: f32[1,128], index: 4, kind: input, shape index: {}]
  %s5 = inlined_call_operand.vmem [shape: f32[8,128], index: 5, kind: output, shape index: {}]
  %s6 = sld [smem:[#allocation0]]
  $region30: #{simple_mlp_forward.1} parent=0
    _
  %s8 = ssub.s32 1, %s6
  %s9 = scalar_select 0, %s8, %s6
  // Predicated region
  $region2: #{simple_mlp_forward.1} parent=0 // pred_check
    _
  $region3: #{simple_mlp_forward.1} parent=0 // pred_check_branch
    %11 = sbr.rel (0) target = $region5
  $region4: #{simple_mlp_forward.1} parent=0 // pred_region
    _
  $region5: #{simple_mlp_forward.1} parent=0 // pred_fallthru
    _
  // Predicated region
  $region6: #{simple_mlp_forward.1} parent=0 // pred_check
    _
  $region7: #{simple_mlp_forward.1} parent=0 // pred_check_branch
    %13 = sbr.rel (0) target = $region9
  $region8: #{simple_mlp_forward.1} parent=0 // pred_region
    _
  $region9: #{simple_mlp_forward.1} parent=0 // pred_fallthru
    _
  // Predicated region
  $region10: #{simple_mlp_forward.1} parent=0 // pred_check
    _
  $region11: #{simple_mlp_forward.1} parent=0 // pred_check_branch
    %15 = sbr.rel (0) target = $region13
  $region12: #{simple_mlp_forward.1} parent=0 // pred_region
    _
  $region13: #{simple_mlp_forward.1} parent=0 // pred_fallthru
    _
  // Predicated region
  $region14: #{simple_mlp_forward.1} parent=0 // pred_check
    _
  $region15: #{simple_mlp_forward.1} parent=0 // pred_check_branch
    %17 = sbr.rel (0) target = $region17
  $region16: #{simple_mlp_forward.1} parent=0 // pred_region
    _
  $region17: #{simple_mlp_forward.1} parent=0 // pred_fallthru
    _
  // Predicated region
  $region18: #{simple_mlp_forward.1} parent=0 // pred_check
    _
  $region19: #{simple_mlp_forward.1} parent=0 // pred_check_branch
    %19 = sbr.rel (0) target = $region21
  $region20: #{simple_mlp_forward.1} parent=0 // pred_region
    _
  $region21: #{simple_mlp_forward.1} parent=0 // pred_fallthru
    _
  %v21 = vld [vmem:[%s0] sm:$0xf]
  %v22 = vld [vmem:[%s1] sm:$0xf]
  %v23 = vld [vmem:[%s1 + $0x4] sm:$0xf]
  %v24 = vld [vmem:[%s1 + $0x8] sm:$0xf]
  %v25 = vld [vmem:[%s1 + $0xc] sm:$0xf]
  %v26 = vld [vmem:[%s1 + $0x10] sm:$0xf]
  %v27 = vld [vmem:[%s1 + $0x14] sm:$0xf]
  %v28 = vld [vmem:[%s1 + $0x18] sm:$0xf]
  %v29 = vld [vmem:[%s1 + $0x1c] sm:$0xf]
  %v30 = vld [vmem:[%s1 + $0x20] sm:$0xf]
  %v31 = vld [vmem:[%s1 + $0x24] sm:$0xf]
  %v32 = vld [vmem:[%s1 + $0x28] sm:$0xf]
  %v33 = vld [vmem:[%s1 + $0x2c] sm:$0xf]
  %v34 = vld [vmem:[%s1 + $0x30] sm:$0xf]
  %v35 = vld [vmem:[%s1 + $0x34] sm:$0xf]
  %v36 = vld [vmem:[%s1 + $0x38] sm:$0xf]
  %v37 = vld [vmem:[%s1 + $0x3c] sm:$0xf]
  %v38 = vld [vmem:[%s2] sm:$0x1]
  %v40 = vlaneseq
  %v41 = vshrl.u32 %v40, 7
  %v42 = vsub.s32 0, %v41
  %v43 = vrot.slane %v38, %v42
  %v61 = vunpack.c.l.b16 %v22
  %v62 = vunpack.c.l.b16 %v23
  %v63 = vunpack.c.l.b16 %v24
  %v64 = vunpack.c.l.b16 %v25
  %v65 = vunpack.c.l.b16 %v26
  %v66 = vunpack.c.l.b16 %v27
  %v67 = vunpack.c.l.b16 %v28
  %v68 = vunpack.c.l.b16 %v29
  %v69 = vunpack.c.l.b16 %v30
  %v70 = vunpack.c.l.b16 %v31
  %v71 = vunpack.c.l.b16 %v32
  %v72 = vunpack.c.l.b16 %v33
  %v73 = vunpack.c.l.b16 %v34
  %v74 = vunpack.c.l.b16 %v35
  %v75 = vunpack.c.l.b16 %v36
  %v76 = vunpack.c.l.b16 %v37
  %v77 = vpack.c.b16 %v62, %v61
  %v78 = vpack.c.b16 %v64, %v63
  %v79 = vpack.c.b16 %v66, %v65
  %v80 = vpack.c.b16 %v68, %v67
  %v81 = vpack.c.b16 %v70, %v69
  %v82 = vpack.c.b16 %v72, %v71
  %v83 = vpack.c.b16 %v74, %v73
  %v84 = vpack.c.b16 %v76, %v75
  %93 = vmatprep.subr.bf16.mxu0 0
  %94 = vmatpush1.bf16.msra.mxu0 %v84
  %95 = vmatprep.subr.bf16.mxu0 0
  %96 = vmatpush1.bf16.msra.mxu0 %v83
  %97 = vmatprep.subr.bf16.mxu0 0
  %98 = vmatpush1.bf16.msra.mxu0 %v82
  %99 = vmatprep.subr.bf16.mxu0 0
  %100 = vmatpush1.bf16.msra.mxu0 %v81
  %101 = vmatprep.subr.bf16.mxu0 0
  %102 = vmatpush1.bf16.msra.mxu0 %v80
  %103 = vmatprep.subr.bf16.mxu0 0
  %104 = vmatpush1.bf16.msra.mxu0 %v79
  %105 = vmatprep.subr.bf16.mxu0 0
  %106 = vmatpush1.bf16.msra.mxu0 %v78
  %107 = vmatprep.subr.bf16.mxu0 0
  %108 = vmatpush1.bf16.msra.mxu0 %v77
  %109 = vmatprep.subr.bf16.mxu0 0
  %110 = vmatpush2.bf16.msra.mxu0 0
  %111 = vmatprep.subr.bf16.mxu0 0
  %112 = vmatpush2.bf16.msra.mxu0 0
  %113 = vmatprep.subr.bf16.mxu0 0
  %114 = vmatpush2.bf16.msra.mxu0 0
  %115 = vmatprep.subr.bf16.mxu0 0
  %116 = vmatpush2.bf16.msra.mxu0 0
  %117 = vmatprep.subr.bf16.mxu0 0
  %118 = vmatpush2.bf16.msra.mxu0 0
  %119 = vmatprep.subr.bf16.mxu0 0
  %120 = vmatpush2.bf16.msra.mxu0 0
  %121 = vmatprep.subr.bf16.mxu0 0
  %122 = vmatpush2.bf16.msra.mxu0 0
  %123 = vmatprep.subr.bf16.mxu0 0
  %124 = vmatpush2.bf16.msra.mxu0 0
  %125 = vmatprep.mubr.bf16.mxu0 0
  %126 = vmatmul.mubr.bf16.gmra.mxu0 %v21
  %v127 = vpop.f32.mrf.mxu0
  %v128 = vadd.f32 %v43, %v127
  %v129 = vpop.f32.mrf.mxu0
  %v130 = vpop.f32.mrf.mxu0
  %v131 = vpop.f32.mrf.mxu0
  %132 = vdwg.mxu0
  %v133 = vmax.f32 %v128, 0.0
  %v134 = vpack.c.bf16 %v133, %v133
  %v135 = vld [vmem:[%s3] sm:$0xf]
  %v136 = vld [vmem:[%s3 + $0x4] sm:$0xf]
  %v137 = vld [vmem:[%s3 + $0x8] sm:$0xf]
  %v138 = vld [vmem:[%s3 + $0xc] sm:$0xf]
  %v139 = vld [vmem:[%s3 + $0x10] sm:$0xf]
  %v140 = vld [vmem:[%s3 + $0x14] sm:$0xf]
  %v141 = vld [vmem:[%s3 + $0x18] sm:$0xf]
  %v142 = vld [vmem:[%s3 + $0x1c] sm:$0xf]
  %v143 = vld [vmem:[%s3 + $0x20] sm:$0xf]
  %v144 = vld [vmem:[%s3 + $0x24] sm:$0xf]
  %v145 = vld [vmem:[%s3 + $0x28] sm:$0xf]
  %v146 = vld [vmem:[%s3 + $0x2c] sm:$0xf]
  %v147 = vld [vmem:[%s3 + $0x30] sm:$0xf]
  %v148 = vld [vmem:[%s3 + $0x34] sm:$0xf]
  %v149 = vld [vmem:[%s3 + $0x38] sm:$0xf]
  %v150 = vld [vmem:[%s3 + $0x3c] sm:$0xf]
  %v151 = vld [vmem:[%s4] sm:$0x1]
  %v153 = vlaneseq
  %v154 = vshrl.u32 %v153, 7
  %v155 = vsub.s32 0, %v154
  %v156 = vrot.slane %v151, %v155
  %v174 = vunpack.c.l.b16 %v135
  %v175 = vunpack.c.l.b16 %v136
  %v176 = vunpack.c.l.b16 %v137
  %v177 = vunpack.c.l.b16 %v138
  %v178 = vunpack.c.l.b16 %v139
  %v179 = vunpack.c.l.b16 %v140
  %v180 = vunpack.c.l.b16 %v141
  %v181 = vunpack.c.l.b16 %v142
  %v182 = vunpack.c.l.b16 %v143
  %v183 = vunpack.c.l.b16 %v144
  %v184 = vunpack.c.l.b16 %v145
  %v185 = vunpack.c.l.b16 %v146
  %v186 = vunpack.c.l.b16 %v147
  %v187 = vunpack.c.l.b16 %v148
  %v188 = vunpack.c.l.b16 %v149
  %v189 = vunpack.c.l.b16 %v150
  %v190 = vpack.c.b16 %v175, %v174
  %v191 = vpack.c.b16 %v177, %v176
  %v192 = vpack.c.b16 %v179, %v178
  %v193 = vpack.c.b16 %v181, %v180
  %v194 = vpack.c.b16 %v183, %v182
  %v195 = vpack.c.b16 %v185, %v184
  %v196 = vpack.c.b16 %v187, %v186
  %v197 = vpack.c.b16 %v189, %v188
  %206 = vmatprep.subr.bf16.mxu0 0
  %207 = vmatpush1.bf16.msra.mxu0 %v197
  %208 = vmatprep.subr.bf16.mxu0 0
  %209 = vmatpush1.bf16.msra.mxu0 %v196
  %210 = vmatprep.subr.bf16.mxu0 0
  %211 = vmatpush1.bf16.msra.mxu0 %v195
  %212 = vmatprep.subr.bf16.mxu0 0
  %213 = vmatpush1.bf16.msra.mxu0 %v194
  %214 = vmatprep.subr.bf16.mxu0 0
  %215 = vmatpush1.bf16.msra.mxu0 %v193
  %216 = vmatprep.subr.bf16.mxu0 0
  %217 = vmatpush1.bf16.msra.mxu0 %v192
  %218 = vmatprep.subr.bf16.mxu0 0
  %219 = vmatpush1.bf16.msra.mxu0 %v191
  %220 = vmatprep.subr.bf16.mxu0 0
  %221 = vmatpush1.bf16.msra.mxu0 %v190
  %222 = vmatprep.subr.bf16.mxu0 0
  %223 = vmatpush2.bf16.msra.mxu0 0
  %224 = vmatprep.subr.bf16.mxu0 0
  %225 = vmatpush2.bf16.msra.mxu0 0
  %226 = vmatprep.subr.bf16.mxu0 0
  %227 = vmatpush2.bf16.msra.mxu0 0
  %228 = vmatprep.subr.bf16.mxu0 0
  %229 = vmatpush2.bf16.msra.mxu0 0
  %230 = vmatprep.subr.bf16.mxu0 0
  %231 = vmatpush2.bf16.msra.mxu0 0
  %232 = vmatprep.subr.bf16.mxu0 0
  %233 = vmatpush2.bf16.msra.mxu0 0
  %234 = vmatprep.subr.bf16.mxu0 0
  %235 = vmatpush2.bf16.msra.mxu0 0
  %236 = vmatprep.subr.bf16.mxu0 0
  %237 = vmatpush2.bf16.msra.mxu0 0
  %238 = vmatprep.mubr.bf16.mxu0 0
  %239 = vmatmul.mubr.bf16.gmra.mxu0 %v134
  %v240 = vpop.f32.mrf.mxu0
  %v241 = vadd.f32 %v156, %v240
  %v242 = vpop.f32.mrf.mxu0
  %v243 = vpop.f32.mrf.mxu0
  %v244 = vpop.f32.mrf.mxu0
  %245 = vdwg.mxu0
  %246 = vst [vmem:[%s5] sm:$0xff] %v241
  // Predicated region
  $region22: #{simple_mlp_forward.1} parent=0 // pred_check
    _
  $region23: #{simple_mlp_forward.1} parent=0 // pred_check_branch
    %248 = sbr.rel (0) target = $region25
  $region24: #{simple_mlp_forward.1} parent=0 // pred_region
    _
  $region25: #{simple_mlp_forward.1} parent=0 // pred_fallthru
    _
  // Predicated region
  $region26: #{simple_mlp_forward.1} parent=0 // pred_check
    _
  $region27: #{simple_mlp_forward.1} parent=0 // pred_check_branch
    %250 = sbr.rel (0) target = $region29
  $region28: #{simple_mlp_forward.1} parent=0 // pred_region
    _
  $region29: #{simple_mlp_forward.1} parent=0 // pred_fallthru
    _

</llo_original>
